<compile_context>
chip_gen: v5e
topology: v5e:2x2
jax: 0.10.0
libtpu: 0.0.40
codegen_flags: <defaults>
</compile_context>

<pallas_src>
import jax
import jax.numpy as jnp
from jax.experimental import pallas as pl
from jax.experimental.pallas import tpu as pltpu


def _rope_kernel(x_ref, cos_ref, sin_ref, o_ref):
    # x_ref:   (ts, R, D)  VMEM tile — R = B*H on sublanes, D on lanes
    # cos_ref: (ts, 1, D)  VMEM tile, broadcast-ready across the sublane axis
    # sin_ref: (ts, 1, D)  VMEM tile, rotate-half sign already folded in
    x = x_ref[...]
    d2 = x.shape[-1] // 2

    # rotate-half: lane roll by D/2 (XLU slot — effectively free in a
    # DMA-bound kernel).  rolled[..., j] = x[..., j + d2] for j < d2,
    # x[..., j - d2] for j >= d2.
    x_rot = pltpu.roll(x, shift=d2, axis=2)

    # (ts, 1, D) tables broadcast over the R sublanes; dtype of the tables
    # (f32 or bf16) sets the compute precision.
    o_ref[...] = (x * cos_ref[...] + x_rot * sin_ref[...]).astype(o_ref.dtype)


_TABLE_CACHE: dict = {}


def _rope_tables(S: int, D: int, base: int, table_dtype):
    """cos / sign-folded-sin tables shaped (S, 1, D), cached per static key."""
    key = (S, D, base, jnp.dtype(table_dtype).name)
    hit = _TABLE_CACHE.get(key)
    if hit is not None:
        return hit
    d2 = D // 2
    theta = 1.0 / (base ** (jnp.arange(0, D, 2, dtype=jnp.float32) / D))   # (D/2,)
    idx = jnp.arange(S, dtype=jnp.float32)[:, None] * theta[None, :]       # (S, D/2)
    idx2 = jnp.concatenate([idx, idx], axis=1)                             # (S, D)
    cos_t = jnp.cos(idx2)
    sin_t = jnp.sin(idx2)
    # Fold the rotate-half sign into the sin table: first half negative.
    sin_signed = jnp.concatenate([-sin_t[:, :d2], sin_t[:, d2:]], axis=1)
    cos3 = cos_t.astype(table_dtype)[:, None, :]       # (S, 1, D)
    sin3 = sin_signed.astype(table_dtype)[:, None, :]  # (S, 1, D)
    _TABLE_CACHE[key] = (cos3, sin3)
    return cos3, sin3


def _vmem_capacity_bytes() -> int:
    """Physical VMEM of the current chip; conservative 64 MiB fallback (v7x)."""
    try:
        info = pltpu.get_tpu_info()
        cap = getattr(info, "vmem_capacity_bytes", None)
        if cap:
            return int(cap)
    except Exception:
        pass
    return 64 << 20


def rope_forward(x: jax.Array, base: int = 10000, *, inplace: bool = False) -> jax.Array:
    """Apply RoPE to x of shape [seq, batch, heads, d]."""
    S, B, H, D = x.shape
    assert D % 2 == 0, "RoPE requires an even head dimension"
    R = B * H

    # TODO(synk): for head_dim < 128 the lane axis is only D/128 utilized
    # (masked stores); pack several heads per 128-lane row for production
    # shapes with D < 128.  D == 128 (LLaMA) needs no change.
    # TODO(synk): if R = B*H is not a multiple of 8 the sublane dim is padded;
    # pad/merge in the caller for odd head counts if that bandwidth matters.
    # TODO(synk): for extremely large B*H*D where even a ts=1 tile overflows
    # the VMEM budget, add a second grid axis tiling R.

    itemsize = x.dtype.itemsize
    # bf16 tables + bf16 math on bf16 inputs (native VPU on v6e/v7x);
    # f32 everywhere else to match the PyTorch reference precision.
    table_dtype = jnp.bfloat16 if x.dtype == jnp.bfloat16 else jnp.float32
    tab_itemsize = jnp.dtype(table_dtype).itemsize
    cos3, sin3 = _rope_tables(S, D, base, table_dtype)

    # Merge (B, H) into the sublane dim (free contiguous merge).
    x3 = x.reshape(S, R, D)

    # --- tile-size selection -------------------------------------------------
    vmem_cap = _vmem_capacity_bytes()
    # Pipeline buffers: double-buffered in/out x tiles + double-buffered tables.
    per_row_bytes = 4 * R * D * itemsize + 4 * D * tab_itemsize
    ts_vmem_cap = max(1, int(0.5 * vmem_cap) // per_row_bytes)
    ts_target = max(1, (8 << 20) // max(R * D * itemsize, 1))   # ~8 MiB x tiles
    ts = max(1, min(ts_target, ts_vmem_cap, S))
    if ts >= 8:
        ts = (ts // 8) * 8
    # Keep >= 2 grid steps when S allows so the "parallel" axis can shard
    # across both TensorCores on v7x (costs one ~0.35 us step elsewhere).
    if S > 8:
        ts = min(ts, ((pl.cdiv(S, 2) + 7) // 8) * 8)
    ts = max(1, min(ts, S))

    grid = (pl.cdiv(S, ts),)

    # --- VMEM budget: scale with actual need, cap at 75% of physical VMEM ----
    x_tile_bytes = ts * R * D * itemsize
    tab_tile_bytes = ts * D * tab_itemsize
    vmem_need = 4 * x_tile_bytes + 4 * tab_tile_bytes
    vmem_limit = int(min(max(2 * vmem_need, 16 << 20), int(0.75 * vmem_cap)))

    cost = pl.CostEstimate(
        flops=4 * S * R * D,
        transcendentals=0,
        bytes_accessed=2 * S * R * D * itemsize + 2 * S * D * tab_itemsize,
    )

    extra_kwargs = {}
    if inplace:
        # Reuse x's HBM buffer for the output (typical in-place Q/K RoPE).
        extra_kwargs["input_output_aliases"] = {0: 0}

    out3 = pl.pallas_call(
        _rope_kernel,
        out_shape=jax.ShapeDtypeStruct((S, R, D), x.dtype),
        grid_spec=pltpu.PrefetchScalarGridSpec(
            num_scalar_prefetch=0,
            grid=grid,
            in_specs=[
                pl.BlockSpec((ts, R, D), lambda i: (i, 0, 0)),
                pl.BlockSpec((ts, 1, D), lambda i: (i, 0, 0)),
                pl.BlockSpec((ts, 1, D), lambda i: (i, 0, 0)),
            ],
            out_specs=pl.BlockSpec((ts, R, D), lambda i: (i, 0, 0)),
        ),
        compiler_params=pltpu.CompilerParams(
            dimension_semantics=("parallel",),
            vmem_limit_bytes=vmem_limit,
        ),
        cost_estimate=cost,
        **extra_kwargs,
    )(x3, cos3, sin3)

    return out3.reshape(S, B, H, D)


def _rope_ref(x: jax.Array, base: int = 10000) -> jax.Array:
    """Pure-JAX reference mirroring the PyTorch forward (f32 tables)."""
    S, B, H, D = x.shape
    theta = 1.0 / (base ** (jnp.arange(0, D, 2, dtype=jnp.float32) / D))
    seq_idx = jnp.arange(S, dtype=jnp.float32)
    idx_theta = jnp.einsum("n,d->nd", seq_idx, theta)
    idx_theta2 = jnp.concatenate([idx_theta, idx_theta], axis=1)
    cos = jnp.cos(idx_theta2)[:, None, None, :]
    sin = jnp.sin(idx_theta2)[:, None, None, :]
    d2 = D // 2
    neg_half = jnp.concatenate([-x[..., d2:], x[..., :d2]], axis=-1)
    return (x * cos + neg_half * sin).astype(x.dtype)


if __name__ == "__main__":
    key = jax.random.PRNGKey(0)

    # Small demo shape: seq=8, batch=2, heads=4, head_dim=32 (f32 path).
    S, B, H, D = 8, 2, 4, 32
    x = jax.random.normal(key, (S, B, H, D), dtype=jnp.float32)
    out = jax.block_until_ready(rope_forward(x))
    ref = _rope_ref(x)
    assert out.shape == (S, B, H, D)
    assert jnp.allclose(out, ref, atol=1e-5, rtol=1e-5), "f32 mismatch vs reference"

    # Non-multiple seq length (partial last block) + bf16 table/compute path.
    S2 = 24
    xb = jax.random.normal(jax.random.PRNGKey(1), (S2, B, H, D), dtype=jnp.bfloat16)
    outb = jax.block_until_ready(rope_forward(xb))
    refb = _rope_ref(xb).astype(jnp.float32)
    assert outb.shape == (S2, B, H, D) and outb.dtype == jnp.bfloat16
    assert jnp.allclose(outb.astype(jnp.float32), refb, atol=0.125, rtol=0.05), \
        "bf16 mismatch vs reference"

    print("KERNEL_OK")
</pallas_src>

<mosaic_0001>
module attributes {stable_mosaic.version = 11 : i64} {
  func.func @_rope_kernel(%arg0: i32, %arg1: memref<8x8x32xf32, #tpu.memory_space<vmem>>, %arg2: memref<8x1x32xf32, #tpu.memory_space<vmem>>, %arg3: memref<8x1x32xf32, #tpu.memory_space<vmem>>, %arg4: memref<8x8x32xf32, #tpu.memory_space<vmem>>) attributes {dimension_semantics = [#tpu.dimension_semantics<parallel>], iteration_bounds = array<i64: 1>, scalar_prefetch = 0 : i64, scratch_operands = 0 : i64, tpu.core_type = #tpu.core_type<tc>, window_params = [{transform_indices = @transform_0, window_bounds = array<i64: 8, 8, 32>}, {transform_indices = @transform_1, window_bounds = array<i64: 8, 1, 32>}, {transform_indices = @transform_2, window_bounds = array<i64: 8, 1, 32>}, {transform_indices = @transform_3, window_bounds = array<i64: 8, 8, 32>}]} {
    %c0 = arith.constant 0 : index
    %c0_0 = arith.constant 0 : index
    %c0_1 = arith.constant 0 : index
    %0 = vector.load %arg1[%c0, %c0_0, %c0_1] : memref<8x8x32xf32, #tpu.memory_space<vmem>>, vector<8x8x32xf32>
    %c16_i32 = arith.constant 16 : i32
    %1 = tpu.dynamic_rotate %0 by %c16_i32 dim 2 : vector<8x8x32xf32>, i32 -> vector<8x8x32xf32>
    %c0_2 = arith.constant 0 : index
    %c0_3 = arith.constant 0 : index
    %c0_4 = arith.constant 0 : index
    %2 = vector.load %arg2[%c0_2, %c0_3, %c0_4] : memref<8x1x32xf32, #tpu.memory_space<vmem>>, vector<8x1x32xf32>
    %3 = vector.broadcast %2 : vector<8x1x32xf32> to vector<8x8x32xf32>
    %4 = arith.mulf %0, %3 : vector<8x8x32xf32>
    %c0_5 = arith.constant 0 : index
    %c0_6 = arith.constant 0 : index
    %c0_7 = arith.constant 0 : index
    %5 = vector.load %arg3[%c0_5, %c0_6, %c0_7] : memref<8x1x32xf32, #tpu.memory_space<vmem>>, vector<8x1x32xf32>
    %6 = vector.broadcast %5 : vector<8x1x32xf32> to vector<8x8x32xf32>
    %7 = arith.mulf %1, %6 : vector<8x8x32xf32>
    %8 = arith.addf %4, %7 : vector<8x8x32xf32>
    %c0_8 = arith.constant 0 : index
    %c0_9 = arith.constant 0 : index
    %c0_10 = arith.constant 0 : index
    %9 = vector.load %arg4[%c0_8, %c0_9, %c0_10] : memref<8x8x32xf32, #tpu.memory_space<vmem>>, vector<8x8x32xf32>
    tpu.vector_store %arg4[%c0_8, %c0_9, %c0_10], %8 {strides = array<i32>} : memref<8x8x32xf32, #tpu.memory_space<vmem>>, vector<8x8x32xf32>,
    return
  }
  func.func @transform_0(%arg0: i32) -> (i32, i32, i32) {
    %c0_i32 = arith.constant 0 : i32
    %c0_i32_0 = arith.constant 0 : i32
    %c0_i32_1 = arith.constant 0 : i32
    return %arg0, %c0_i32, %c0_i32_0 : i32, i32, i32
  }
  func.func @transform_1(%arg0: i32) -> (i32, i32, i32) {
    %c0_i32 = arith.constant 0 : i32
    %c0_i32_0 = arith.constant 0 : i32
    %c0_i32_1 = arith.constant 0 : i32
    return %arg0, %c0_i32, %c0_i32_0 : i32, i32, i32
  }
  func.func @transform_2(%arg0: i32) -> (i32, i32, i32) {
    %c0_i32 = arith.constant 0 : i32
    %c0_i32_0 = arith.constant 0 : i32
    %c0_i32_1 = arith.constant 0 : i32
    return %arg0, %c0_i32, %c0_i32_0 : i32, i32, i32
  }
  func.func @transform_3(%arg0: i32) -> (i32, i32, i32) {
    %c0_i32 = arith.constant 0 : i32
    %c0_i32_0 = arith.constant 0 : i32
    %c0_i32_1 = arith.constant 0 : i32
    return %arg0, %c0_i32, %c0_i32_0 : i32, i32, i32
  }
}

</mosaic_0001>

<llo_original>
// kernel: tpu_custom_call.1
$region0: #{tpu_custom_call.1}
  #allocation0 [shape = 'u32[]', space=smem, size = 0x4, offset = 0x4, fixed_abs, tag = 'smem constant byte address 0x4 - core index']
  #allocation1 [shape = 'u32[72,128]{1,0:T(1,128)}', space=vmem, size = 0x9000, scoped, tag = 'internal scratch']
  %s0 = inlined_call_operand.hbm [shape: f32[8,8,32], index: 0, kind: input, shape index: {}]
  %s1 = inlined_call_operand.hbm [shape: f32[8,1,32], index: 1, kind: input, shape index: {}]
  %s2 = inlined_call_operand.hbm [shape: f32[8,1,32], index: 2, kind: input, shape index: {}]
  %s3 = inlined_call_operand.hbm [shape: f32[8,8,32], index: 3, kind: output, shape index: {}]
  %s4 = sld [smem:[#allocation0]]
  $region34: #{tpu_custom_call.1} parent=0
    _
  %s6 = ssub.s32 1, %s4
  %s7 = scalar_select 0, %s6, %s4
  $region1: #{tpu_custom_call.1} parent=0
    #allocation2 [shape = 'u8[32768]{0}', space=vmem, size = 0x8000, scoped, tag = 'input window, operand 0, single buffered']
    #allocation3 [shape = 's32[1]{0}', space=sflag, size = 0x4, scoped, tag = 'scoped memory for tpu_custom_call.1']
    #allocation4 [shape = 's32[1]{0}', space=sflag, size = 0x4, scoped, tag = 'scoped memory for tpu_custom_call.1']
    #allocation5 [shape = 'u8[4096]{0}', space=vmem, size = 0x1000, scoped, tag = 'input window, operand 1, single buffered']
    #allocation6 [shape = 's32[1]{0}', space=sflag, size = 0x4, scoped, tag = 'scoped memory for tpu_custom_call.1']
    #allocation7 [shape = 'u8[4096]{0}', space=vmem, size = 0x1000, scoped, tag = 'input window, operand 2, single buffered']
    #allocation8 [shape = 'u8[32768]{0}', space=vmem, size = 0x8000, scoped, tag = 'output window, operand 0, single buffered']
    %8 = vsyncpa [#allocation3], 0
    %9 = vsyncpa [#allocation6], 0
    %10 = vsyncpa [#allocation4], 0
    // Predicated region
    $region2: #{tpu_custom_call.1} parent=1 // pred_check
      _
    $region3: #{tpu_custom_call.1} parent=1 // pred_check_branch
      %12 = sbr.rel (0) target = $region5
    $region4: #{tpu_custom_call.1} parent=1 // pred_region
      %14 = vsyncadd [#allocation3], 0
      %s15 = sshll.u32 %s0, 4
      %s16 = int_to_ptr.hbm [resolvable:$true] %s15
      %s17 = sshll.u32 [#allocation2], 4
      %s18 = int_to_ptr.vmem [resolvable:$true] %s17
      %23 = dma.hbm_to_vmem [thread:$0]  %s16, 1024, %s18, [#allocation3], 128, 128, 8
    $region5: #{tpu_custom_call.1} parent=1 // pred_fallthru
      _
    // Predicated region
    $region6: #{tpu_custom_call.1} parent=1 // pred_check
      _
    $region7: #{tpu_custom_call.1} parent=1 // pred_check_branch
      %25 = sbr.rel (0) target = $region9
    $region8: #{tpu_custom_call.1} parent=1 // pred_region
      %27 = vsyncadd [#allocation6], 0
      %s28 = sshll.u32 %s1, 4
      %s29 = int_to_ptr.hbm [resolvable:$true] %s28
      %s30 = sshll.u32 [#allocation5], 4
      %s31 = int_to_ptr.vmem [resolvable:$true] %s30
      %36 = dma.hbm_to_vmem [thread:$0]  %s29, 128, %s31, [#allocation6], 16, 16, 1
    $region9: #{tpu_custom_call.1} parent=1 // pred_fallthru
      _
    // Predicated region
    $region10: #{tpu_custom_call.1} parent=1 // pred_check
      _
    $region11: #{tpu_custom_call.1} parent=1 // pred_check_branch
      %38 = sbr.rel (0) target = $region13
    $region12: #{tpu_custom_call.1} parent=1 // pred_region
      %40 = vsyncadd [#allocation6], 0
      %s41 = sshll.u32 %s2, 4
      %s42 = int_to_ptr.hbm [resolvable:$true] %s41
      %s43 = sshll.u32 [#allocation7], 4
      %s44 = int_to_ptr.vmem [resolvable:$true] %s43
      %49 = dma.hbm_to_vmem [thread:$0]  %s42, 128, %s44, [#allocation6], 16, 16, 1
    $region13: #{tpu_custom_call.1} parent=1 // pred_fallthru
      _
    // Predicated region
    $region14: #{tpu_custom_call.1} parent=1 // pred_check
      _
    $region15: #{tpu_custom_call.1} parent=1 // pred_check_branch
      %51 = sbr.rel (0) target = $region17
    $region16: #{tpu_custom_call.1} parent=1 // pred_region
      %53 = dma.done [#allocation3], 1024
    $region17: #{tpu_custom_call.1} parent=1 // pred_fallthru
      _
    // Predicated region
    $region18: #{tpu_custom_call.1} parent=1 // pred_check
      _
    $region19: #{tpu_custom_call.1} parent=1 // pred_check_branch
      %55 = sbr.rel (0) target = $region21
    $region20: #{tpu_custom_call.1} parent=1 // pred_region
      %57 = dma.done [#allocation6], 128
    $region21: #{tpu_custom_call.1} parent=1 // pred_fallthru
      _
    // Predicated region
    $region22: #{tpu_custom_call.1} parent=1 // pred_check
      _
    $region23: #{tpu_custom_call.1} parent=1 // pred_check_branch
      %59 = sbr.rel (0) target = $region25
    $region24: #{tpu_custom_call.1} parent=1 // pred_region
      %61 = dma.done [#allocation6], 128
    $region25: #{tpu_custom_call.1} parent=1 // pred_fallthru
      _
    %v62 = vld [vmem:[#allocation2] sm:$0xff]
    %v63 = vld [vmem:[#allocation2 + $0x8] sm:$0xff]
    %v64 = vld [vmem:[#allocation2 + $0x10] sm:$0xff]
    %v65 = vld [vmem:[#allocation2 + $0x18] sm:$0xff]
    %v66 = vld [vmem:[#allocation2 + $0x20] sm:$0xff]
    %v67 = vld [vmem:[#allocation2 + $0x28] sm:$0xff]
    %v68 = vld [vmem:[#allocation2 + $0x30] sm:$0xff]
    %v69 = vld [vmem:[#allocation2 + $0x38] sm:$0xff]
    %vm70 = vcmask 1047808
    %71 = vrot.lane.b32.xlu0 %v62, 32
    %v72 = vpop.permute.xlu0 %71
    %v73 = vsel %vm70, %v72, %v62
    %74 = vrot.lane.b32.xlu0 %v63, 32
    %v75 = vpop.permute.xlu0 %74
    %v76 = vsel %vm70, %v75, %v63
    %77 = vrot.lane.b32.xlu0 %v64, 32
    %v78 = vpop.permute.xlu0 %77
    %v79 = vsel %vm70, %v78, %v64
    %80 = vrot.lane.b32.xlu0 %v65, 32
    %v81 = vpop.permute.xlu0 %80
    %v82 = vsel %vm70, %v81, %v65
    %83 = vrot.lane.b32.xlu0 %v66, 32
    %v84 = vpop.permute.xlu0 %83
    %v85 = vsel %vm70, %v84, %v66
    %86 = vrot.lane.b32.xlu0 %v67, 32
    %v87 = vpop.permute.xlu0 %86
    %v88 = vsel %vm70, %v87, %v67
    %89 = vrot.lane.b32.xlu0 %v68, 32
    %v90 = vpop.permute.xlu0 %89
    %v91 = vsel %vm70, %v90, %v68
    %92 = vrot.lane.b32.xlu0 %v69, 32
    %v93 = vpop.permute.xlu0 %92
    %v94 = vsel %vm70, %v93, %v69
    %95 = vrot.lane.b32.xlu0 %v73, 32
    %v96 = vpop.permute.xlu0 %95
    %97 = vrot.lane.b32.xlu0 %v76, 32
    %v98 = vpop.permute.xlu0 %97
    %99 = vrot.lane.b32.xlu0 %v79, 32
    %v100 = vpop.permute.xlu0 %99
    %101 = vrot.lane.b32.xlu0 %v82, 32
    %v102 = vpop.permute.xlu0 %101
    %103 = vrot.lane.b32.xlu0 %v85, 32
    %v104 = vpop.permute.xlu0 %103
    %105 = vrot.lane.b32.xlu0 %v88, 32
    %v106 = vpop.permute.xlu0 %105
    %107 = vrot.lane.b32.xlu0 %v91, 32
    %v108 = vpop.permute.xlu0 %107
    %109 = vrot.lane.b32.xlu0 %v94, 32
    %v110 = vpop.permute.xlu0 %109
    %v111 = vsel %vm70, %v96, %v62
    %v112 = vsel %vm70, %v98, %v63
    %v113 = vsel %vm70, %v100, %v64
    %v114 = vsel %vm70, %v102, %v65
    %v115 = vsel %vm70, %v104, %v66
    %v116 = vsel %vm70, %v106, %v67
    %v117 = vsel %vm70, %v108, %v68
    %v118 = vsel %vm70, %v110, %v69
    %v119 = vld [vmem:[#allocation5] sm:$0x1]
    %v120 = vld [vmem:[#allocation5 + $0x1] sm:$0x1]
    %v121 = vld [vmem:[#allocation5 + $0x2] sm:$0x1]
    %v122 = vld [vmem:[#allocation5 + $0x3] sm:$0x1]
    %v123 = vld [vmem:[#allocation5 + $0x4] sm:$0x1]
    %v124 = vld [vmem:[#allocation5 + $0x5] sm:$0x1]
    %v125 = vld [vmem:[#allocation5 + $0x6] sm:$0x1]
    %v126 = vld [vmem:[#allocation5 + $0x7] sm:$0x1]
    %v135 = vperm.slane %v119, 0
    %v136 = vperm.slane %v120, 0
    %v137 = vperm.slane %v121, 0
    %v138 = vperm.slane %v122, 0
    %v139 = vperm.slane %v123, 0
    %v140 = vperm.slane %v124, 0
    %v141 = vperm.slane %v125, 0
    %v142 = vperm.slane %v126, 0
    %v151 = vmul.f32 %v62, %v135
    %v152 = vmul.f32 %v63, %v136
    %v153 = vmul.f32 %v64, %v137
    %v154 = vmul.f32 %v65, %v138
    %v155 = vmul.f32 %v66, %v139
    %v156 = vmul.f32 %v67, %v140
    %v157 = vmul.f32 %v68, %v141
    %v158 = vmul.f32 %v69, %v142
    %v159 = vld [vmem:[#allocation7] sm:$0x1]
    %v160 = vld [vmem:[#allocation7 + $0x1] sm:$0x1]
    %v161 = vld [vmem:[#allocation7 + $0x2] sm:$0x1]
    %v162 = vld [vmem:[#allocation7 + $0x3] sm:$0x1]
    %v163 = vld [vmem:[#allocation7 + $0x4] sm:$0x1]
    %v164 = vld [vmem:[#allocation7 + $0x5] sm:$0x1]
    %v165 = vld [vmem:[#allocation7 + $0x6] sm:$0x1]
    %v166 = vld [vmem:[#allocation7 + $0x7] sm:$0x1]
    %v175 = vperm.slane %v159, 0
    %v176 = vperm.slane %v160, 0
    %v177 = vperm.slane %v161, 0
    %v178 = vperm.slane %v162, 0
    %v179 = vperm.slane %v163, 0
    %v180 = vperm.slane %v164, 0
    %v181 = vperm.slane %v165, 0
    %v182 = vperm.slane %v166, 0
    %183 = vrot.lane.b32.xlu0 %v175, 16
    %v184 = vpop.permute.xlu0 %183
    %185 = vrot.lane.b32.xlu0 %v176, 16
    %v186 = vpop.permute.xlu0 %185
    %187 = vrot.lane.b32.xlu0 %v177, 16
    %v188 = vpop.permute.xlu0 %187
    %189 = vrot.lane.b32.xlu0 %v178, 16
    %v190 = vpop.permute.xlu0 %189
    %191 = vrot.lane.b32.xlu0 %v179, 16
    %v192 = vpop.permute.xlu0 %191
    %193 = vrot.lane.b32.xlu0 %v180, 16
    %v194 = vpop.permute.xlu0 %193
    %195 = vrot.lane.b32.xlu0 %v181, 16
    %v196 = vpop.permute.xlu0 %195
    %197 = vrot.lane.b32.xlu0 %v182, 16
    %v198 = vpop.permute.xlu0 %197
    %v207 = vmul.f32 %v111, %v184
    %v208 = vmul.f32 %v112, %v186
    %v209 = vmul.f32 %v113, %v188
    %v210 = vmul.f32 %v114, %v190
    %v211 = vmul.f32 %v115, %v192
    %v212 = vmul.f32 %v116, %v194
    %v213 = vmul.f32 %v117, %v196
    %v214 = vmul.f32 %v118, %v198
    %223 = vrot.lane.b32.xlu0 %v207, 112
    %v224 = vpop.permute.xlu0 %223
    %225 = vrot.lane.b32.xlu0 %v208, 112
    %v226 = vpop.permute.xlu0 %225
    %227 = vrot.lane.b32.xlu0 %v209, 112
    %v228 = vpop.permute.xlu0 %227
    %229 = vrot.lane.b32.xlu0 %v210, 112
    %v230 = vpop.permute.xlu0 %229
    %231 = vrot.lane.b32.xlu0 %v211, 112
    %v232 = vpop.permute.xlu0 %231
    %233 = vrot.lane.b32.xlu0 %v212, 112
    %v234 = vpop.permute.xlu0 %233
    %235 = vrot.lane.b32.xlu0 %v213, 112
    %v236 = vpop.permute.xlu0 %235
    %237 = vrot.lane.b32.xlu0 %v214, 112
    %v238 = vpop.permute.xlu0 %237
    %v247 = vadd.f32 %v151, %v224
    %v248 = vadd.f32 %v152, %v226
    %v249 = vadd.f32 %v153, %v228
    %v250 = vadd.f32 %v154, %v230
    %v251 = vadd.f32 %v155, %v232
    %v252 = vadd.f32 %v156, %v234
    %v253 = vadd.f32 %v157, %v236
    %v254 = vadd.f32 %v158, %v238
    %vm255 = vcmask 261120
    %256 = vst.msk [vmem:[#allocation8] sm:$0xff] %vm255, %v247
    %257 = vst.msk [vmem:[#allocation8 + $0x8] sm:$0xff] %vm255, %v248
    %258 = vst.msk [vmem:[#allocation8 + $0x10] sm:$0xff] %vm255, %v249
    %259 = vst.msk [vmem:[#allocation8 + $0x18] sm:$0xff] %vm255, %v250
    %260 = vst.msk [vmem:[#allocation8 + $0x20] sm:$0xff] %vm255, %v251
    %261 = vst.msk [vmem:[#allocation8 + $0x28] sm:$0xff] %vm255, %v252
    %262 = vst.msk [vmem:[#allocation8 + $0x30] sm:$0xff] %vm255, %v253
    %263 = vst.msk [vmem:[#allocation8 + $0x38] sm:$0xff] %vm255, %v254
    // Predicated region
    $region26: #{tpu_custom_call.1} parent=1 // pred_check
      _
    $region27: #{tpu_custom_call.1} parent=1 // pred_check_branch
      %265 = sbr.rel (0) target = $region29
    $region28: #{tpu_custom_call.1} parent=1 // pred_region
      %267 = vsyncadd [#allocation4], 0
      %s268 = sshll.u32 [#allocation8], 4
      %s269 = int_to_ptr.vmem [resolvable:$true] %s268
      %s270 = sshll.u32 %s3, 4
      %s271 = int_to_ptr.hbm [resolvable:$true] %s270
      %276 = dma.vmem_to_hbm [thread:$0]  %s269, 1024, %s271, [#allocation4], 128, 128, 8
    $region29: #{tpu_custom_call.1} parent=1 // pred_fallthru
      _
    // Predicated region
    $region30: #{tpu_custom_call.1} parent=1 // pred_check
      _
    $region31: #{tpu_custom_call.1} parent=1 // pred_check_branch
      %278 = sbr.rel (0) target = $region33
    $region32: #{tpu_custom_call.1} parent=1 // pred_region
      %280 = dma.done [#allocation4], 1024
    $region33: #{tpu_custom_call.1} parent=1 // pred_fallthru
      _
    %281 = vsyncpa [#allocation3], 1
    %282 = vsyncpa [#allocation6], 1
    %283 = vsyncpa [#allocation4], 1

</llo_original>
